<compile_context>
chip_gen: v7x
topology: tpu7x:2x2x1
jax: 0.10.0
libtpu: 0.0.40
codegen_flags: <defaults>
</compile_context>

<pallas_src>
import math

import jax
import jax.numpy as jnp
from jax.experimental import pallas as pl
from jax.experimental.pallas import tpu as pltpu


def _copy_block_kernel(x_ref, o_ref):
    # One (tm, tn) tile.  The grid's trailing "copy" axis decides which half
    # of the output this tile lands in, so the body is a single lane-aligned
    # full-block store (no concat, no lane-shifted masked stores).
    o_ref[...] = x_ref[...]


def _double_cat_small_kernel(x_ref, o_ref):
    # Fallback for non-lane-aligned N: whole array resident in VMEM.
    # Only used for small inputs (see size note in the wrapper).
    x = x_ref[...]
    n = x_ref.shape[-1]
    o_ref[:, :n] = x
    o_ref[:, n:] = x


def _choose_tiles(m, n, itemsize, target_bytes):
    """Pick (tm, tn): tn a 128-multiple divisor of n, tm an 8-multiple (or m)."""
    # Column tile: full width if an 8-row strip fits the budget, otherwise the
    # largest 128-multiple divisor of n whose 8-row strip fits the budget.
    if 8 * n * itemsize <= target_bytes:
        tn = n
    else:
        tn = 128  # always valid: caller guarantees n % 128 == 0
        t = 256
        while t <= n and 8 * t * itemsize <= target_bytes:
            if n % t == 0:
                tn = t
            t += 128
    # Row tile: as many rows as fit the budget at width tn.
    rows_budget = max(8, target_bytes // max(1, tn * itemsize))
    if m <= rows_budget:
        tm = m          # equal-to-full-dim blocks are always legal
    else:
        tm = (rows_budget // 8) * 8
    return tm, tn


def double_identity(x, *, target_block_bytes=1 << 20):
    """Pallas TPU equivalent of torch.cat([x, x], dim=2) for x.ndim >= 3."""
    assert x.ndim >= 3, "DoubleIdentity concatenates along axis 2"
    shape = x.shape
    m = math.prod(shape[:2])
    n = math.prod(shape[2:])
    out_nd_shape = shape[:2] + (2 * shape[2],) + shape[3:]
    itemsize = jnp.dtype(x.dtype).itemsize

    x2d = x.reshape(m, n)

    if n % 128 == 0:
        # --- Pipelined, lane-aligned tiled path (the perf path) -------------
        tm, tn = _choose_tiles(m, n, itemsize, target_block_bytes)
        ncols = n // tn
        grid = (pl.cdiv(m, tm), ncols, 2)  # copy axis innermost -> input reuse

        out2d = pl.pallas_call(
            _copy_block_kernel,
            out_shape=jax.ShapeDtypeStruct((m, 2 * n), x.dtype),
            grid=grid,
            in_specs=[
                # index_map ignores the copy axis c, so the same input block
                # is reused on consecutive steps (no re-fetch DMA).
                pl.BlockSpec((tm, tn), lambda i, j, c: (i, j)),
            ],
            out_specs=pl.BlockSpec(
                (tm, tn), lambda i, j, c: (i, c * ncols + j)
            ),
            compiler_params=pltpu.CompilerParams(
                # Row/column tiles are independent -> parallel (lets v7x's two
                # TensorCores split them); keep the copy axis "arbitrary".
                dimension_semantics=("parallel", "parallel", "arbitrary"),
            ),
        )(x2d)
    else:
        # --- Robustness fallback: N not a multiple of 128 --------------------
        # Whole array in VMEM, two (possibly masked) stores.  Only suitable
        # for inputs well below the scoped-VMEM limit (~5 MiB v5e,
        # ~10 MiB v6e/v7x); lane-aligned inputs never take this path.
        # TODO(synk): for large non-128-aligned N, fold part of dim 2 into the
        # row axis (or use a DMA-only HBM->HBM copy) instead of this path.
        out2d = pl.pallas_call(
            _double_cat_small_kernel,
            out_shape=jax.ShapeDtypeStruct((m, 2 * n), x.dtype),
            in_specs=[pl.BlockSpec(memory_space=pltpu.MemorySpace.VMEM)],
            out_specs=pl.BlockSpec(memory_space=pltpu.MemorySpace.VMEM),
        )(x2d)

    return out2d.reshape(out_nd_shape)


if __name__ == "__main__":
    key = jax.random.PRNGKey(0)

    # Primary (lane-aligned) path: x has >= 3 dims; concat is on dim 2.
    x = jax.random.normal(key, (2, 4, 16, 16), dtype=jnp.float32)
    out = jax.block_until_ready(double_identity(x))
    assert out.shape == (2, 4, 32, 16), out.shape
    assert out.dtype == x.dtype
    ref = jnp.concatenate([x, x], axis=2)
    assert jnp.array_equal(out, ref), "mismatch vs. concatenate reference"

    # Fallback (non-128-aligned trailing block) path on a tiny odd shape.
    x2 = jax.random.normal(jax.random.PRNGKey(1), (2, 3, 5, 7),
                           dtype=jnp.float32)
    out2 = jax.block_until_ready(double_identity(x2))
    assert out2.shape == (2, 3, 10, 7), out2.shape
    ref2 = jnp.concatenate([x2, x2], axis=2)
    assert jnp.array_equal(out2, ref2), "fallback mismatch vs. reference"

    print("KERNEL_OK")
</pallas_src>

<mosaic_0001>
module attributes {stable_mosaic.version = 11 : i64} {
  func.func @_copy_block_kernel(%arg0: i32, %arg1: i32, %arg2: i32, %arg3: memref<8x256xf32, #tpu.memory_space<vmem>>, %arg4: memref<8x256xf32, #tpu.memory_space<vmem>>) attributes {dimension_semantics = [#tpu.dimension_semantics<parallel>, #tpu.dimension_semantics<parallel>, #tpu.dimension_semantics<arbitrary>], iteration_bounds = array<i64: 1, 1, 2>, scalar_prefetch = 0 : i64, scratch_operands = 0 : i64, tpu.core_type = #tpu.core_type<tc>, window_params = [{transform_indices = @transform_0, window_bounds = array<i64: 8, 256>}, {transform_indices = @transform_1, window_bounds = array<i64: 8, 256>}]} {
    %c0 = arith.constant 0 : index
    %c0_0 = arith.constant 0 : index
    %0 = vector.load %arg3[%c0, %c0_0] : memref<8x256xf32, #tpu.memory_space<vmem>>, vector<8x256xf32>
    %c0_1 = arith.constant 0 : index
    %c0_2 = arith.constant 0 : index
    %1 = vector.load %arg4[%c0_1, %c0_2] : memref<8x256xf32, #tpu.memory_space<vmem>>, vector<8x256xf32>
    tpu.vector_store %arg4[%c0_1, %c0_2], %0 {strides = array<i32>} : memref<8x256xf32, #tpu.memory_space<vmem>>, vector<8x256xf32>,
    return
  }
  func.func @transform_0(%arg0: i32, %arg1: i32, %arg2: i32) -> (i32, i32) {
    %c0_i32 = arith.constant 0 : i32
    return %arg0, %arg1 : i32, i32
  }
  func.func @transform_1(%arg0: i32, %arg1: i32, %arg2: i32) -> (i32, i32) {
    %c1_i32 = arith.constant 1 : i32
    %0 = arith.muli %arg2, %c1_i32 : i32
    %1 = arith.addi %0, %arg1 : i32
    %c0_i32 = arith.constant 0 : i32
    return %arg0, %1 : i32, i32
  }
}

</mosaic_0001>

<llo_original>
// kernel: tpu_custom_call.1
$region0: #{tpu_custom_call.1}
  #allocation0 [shape = 'u32[]', space=smem, size = 0x4, offset = 0x4, fixed_abs, tag = 'smem constant byte address 0x4 - core index']
  #allocation1 [shape = 'u32[144,128]{1,0:T(1,128)}', space=vmem, size = 0x12000, scoped, tag = 'internal scratch']
  %s0 = inlined_call_operand.hbm [shape: f32[8,256], index: 0, kind: input, shape index: {}]
  %s1 = inlined_call_operand.hbm [shape: f32[8,512], index: 1, kind: output, shape index: {}]
  %s2 = sld [smem:[#allocation0]]
  $region41: #{tpu_custom_call.1} parent=0
    _
  %s4 = ssub.s32 1, %s2
  %s5 = scalar_select 0, %s4, %s2
  $region1: #{tpu_custom_call.1} parent=0
    #allocation2 [shape = 'u8[8192]{0}', space=vmem, size = 0x2000, scoped, tag = 'input window, operand 0, single buffered']
    #allocation3 [shape = 's32[2]{0}', space=sflag, size = 0x8, scoped, tag = 'scoped memory for tpu_custom_call.1']
    #allocation4 [shape = 's32[2]{0}', space=sflag, size = 0x8, scoped, tag = 'scoped memory for tpu_custom_call.1']
    #allocation5 [shape = 'u8[16384]{0}', space=vmem, size = 0x4000, scoped, tag = 'output window, operand 0']
    %6 = vsyncpa [#allocation3], 0
    %7 = vsyncpa [#allocation4], 0
    %s8 = scalar_lea.sflag [#allocation4], 1
    %9 = vsyncpa %s8, 0
    loop: start=0, step=1, limit=4
    $region2: #{tpu_custom_call.1} parent=1 // loop_pre_header
      _
    $region3: #{tpu_custom_call.1} parent=1 // loop_header
      %s11 = sphi 0, %s15
      %p12 = scmp.ge.s32.totalorder %s11, 4
      %s18 = sphi 0, %s37
      %s19 = sphi 0, %s33
      %s20 = sphi 0, %s29
      %s21 = sphi 0, %s18
      %s22 = sphi 0, %s19
      %s23 = sphi 0, %s20
      %s24 = sphi 0, %s21
      %s25 = sphi 0, %s22
      %s26 = sphi 0, %s23
      %s42 = sphi 0, %s44
      %s45 = sphi 0, %s42
      %s46 = sphi 0, %s45
      %s62 = sphi 0, %s46
      %s72 = sphi 0, %s74
      %s75 = sphi 0, %s72
      %s76 = sphi 0, %s75
      %s92 = sphi 0, %s76
    $region4: #{tpu_custom_call.1} parent=1 // loop_header_branch
      %14 = sbr.rel (%p12) target = $region8
    $region5: #{tpu_custom_call.1} parent=1 // loop_body
      %s16 = ssub.s32 %s11, 1
      %s17 = ssub.s32 %s11, 2
      %s27 = sadd.s32 1, %s20
      %p28 = scmp.ge.s32.totalorder %s27, 2
      %s29 = scalar_select %p28, 0, %s27
      %s30 = sadd.s32 1, %s19
      %s31 = scalar_select %p28, %s30, %s19
      %p32 = scmp.ge.s32.totalorder %s31, 1
      %s33 = scalar_select %p32, 0, %s31
      %s34 = sadd.s32 1, %s18
      %s35 = scalar_select %p32, %s34, %s18
      %p36 = scmp.ge.s32.totalorder %s35, 1
      %s37 = scalar_select %p36, 0, %s35
      %s38 = ssub.s32 %s18, %s37
      %s39 = ssub.s32 %s19, %s33
      %s40 = sor.u32 %s38, %s39
      %p41 = scmp.eq.s32.totalorder %s40, 0
      %s43 = sadd.s32 %s42, 1
      %s44 = scalar_select %p41, %s42, %s43
      %p47 = pneg %p41
      %p48 = scmp.eq.s32.totalorder %s11, 1
      %p49 = por %p47, %p48
      %p50 = scmp.ne.s32.totalorder %s42, %s45
      %p51 = scmp.eq.s32.totalorder %s11, 0
      %p52 = por %p50, %p51
      %p53 = scmp.ne.s32.totalorder %s42, %s45
      %p54 = scmp.eq.s32.totalorder %s16, 1
      %p55 = por %p53, %p54
      %p56 = scmp.ne.s32.totalorder %s45, %s46
      %p57 = scmp.eq.s32.totalorder %s16, 0
      %p58 = por %p56, %p57
      %p59 = scmp.ne.s32.totalorder %s45, %s46
      %p60 = scmp.eq.s32.totalorder %s17, 1
      %p61 = por %p59, %p60
      %p63 = scmp.ne.s32.totalorder %s46, %s62
      %p64 = scmp.eq.s32.totalorder %s17, 0
      %p65 = por %p63, %p64
      %s66 = sadd.s32 %s20, %s19
      %s67 = sadd.s32 %s29, %s33
      %s68 = ssub.s32 %s18, %s37
      %s69 = ssub.s32 %s66, %s67
      %s70 = sor.u32 %s68, %s69
      %p71 = scmp.eq.s32.totalorder %s70, 0
      %s73 = sadd.s32 %s72, 1
      %s74 = scalar_select %p71, %s72, %s73
      %p77 = pneg %p71
      %p78 = scmp.eq.s32.totalorder %s11, 1
      %p79 = por %p77, %p78
      %p80 = scmp.ne.s32.totalorder %s72, %s75
      %p81 = scmp.eq.s32.totalorder %s11, 0
      %p82 = por %p80, %p81
      %p83 = scmp.ne.s32.totalorder %s72, %s75
      %p84 = scmp.eq.s32.totalorder %s16, 1
      %p85 = por %p83, %p84
      %p86 = scmp.ne.s32.totalorder %s75, %s76
      %p87 = scmp.eq.s32.totalorder %s16, 0
      %p88 = por %p86, %p87
      %p89 = scmp.ne.s32.totalorder %s75, %s76
      %p90 = scmp.eq.s32.totalorder %s17, 1
      %p91 = por %p89, %p90
      %p93 = scmp.ne.s32.totalorder %s76, %s92
      %p94 = scmp.eq.s32.totalorder %s17, 0
      %p95 = por %p93, %p94
      %p96 = scmp.le.s32.totalorder 1, %s11
      %p97 = scmp.lt.s32.totalorder %s11, 3
      %p98 = pnand %p96, %p97
      %p99 = pneg %p98
      // Predicated region
      $region9: #{tpu_custom_call.1} parent=5 // pred_check
        _
      $region10: #{tpu_custom_call.1} parent=5 // pred_check_branch
        %101 = sbr.rel (%p98) target = $region12
      $region11: #{tpu_custom_call.1} parent=5 // pred_region
        %s102 = ssub.s32 %s11, 1
        // Predicated region
        $region13: #{tpu_custom_call.1} parent=11 // pred_check
          %p103 = pneg %p58
        $region14: #{tpu_custom_call.1} parent=11 // pred_check_branch
          %105 = sbr.rel (%p103) target = $region16
        $region15: #{tpu_custom_call.1} parent=11 // pred_region
          %s106 = smul.u32 2, %s22
          %s108 = ssub.s32 256, 256
          %109 = vsyncadd [#allocation3], %s108
          %s110 = smul.addr %s21, 2
          %s111 = sadd.s32 %s106, %s110
          %s112 = smul.addr %s111, 128
          %s113 = scalar_lea.hbm %s0, %s112
          %s115 = sshll.u32 [#allocation2], 4
          %s116 = int_to_ptr.vmem [resolvable:$true] %s115
          %118 = dma.hbm_to_vmem [thread:$0]  %s113, 256, %s116, [#allocation3]
        $region16: #{tpu_custom_call.1} parent=11 // pred_fallthru
          _
      $region12: #{tpu_custom_call.1} parent=5 // pred_fallthru
        _
      %p119 = scmp.lt.s32.totalorder %s11, 2
      // Predicated region
      $region17: #{tpu_custom_call.1} parent=5 // pred_check
        %p120 = pneg %p119
      $region18: #{tpu_custom_call.1} parent=5 // pred_check_branch
        %122 = sbr.rel (%p120) target = $region20
      $region19: #{tpu_custom_call.1} parent=5 // pred_region
        _
      $region20: #{tpu_custom_call.1} parent=5 // pred_fallthru
        _
      %p123 = scmp.le.s32.totalorder 1, %s11
      %p124 = scmp.lt.s32.totalorder %s11, 3
      %p125 = pnand %p123, %p124
      %p126 = pneg %p125
      // Predicated region
      $region21: #{tpu_custom_call.1} parent=5 // pred_check
        _
      $region22: #{tpu_custom_call.1} parent=5 // pred_check_branch
        %128 = sbr.rel (%p125) target = $region24
      $region23: #{tpu_custom_call.1} parent=5 // pred_region
        %s129 = ssub.s32 %s11, 1
        // Predicated region
        $region25: #{tpu_custom_call.1} parent=23 // pred_check
          %p130 = pneg %p58
        $region26: #{tpu_custom_call.1} parent=23 // pred_check_branch
          %132 = sbr.rel (%p130) target = $region28
        $region27: #{tpu_custom_call.1} parent=23 // pred_region
          %133 = dma.done [#allocation3], 256
        $region28: #{tpu_custom_call.1} parent=23 // pred_fallthru
          _
        %p134 = pneg %p58
        %p135 = pneg %p55
        %p136 = pneg %p88
        %p137 = pneg %p85
        %s138 = sand.u32 %s75, 1
        %s139 = scalar_lea.sflag [#allocation4], %s138
        %s140 = sand.u32 %s75, 1
        %s141 = smul.addr %s140, 16
        %s142 = scalar_lea.vmem [#allocation5], %s141
        %s143 = smul.u32 2, %s22
        %s144 = sadd.s32 %s23, %s22
        %s145 = smul.u32 2, %s144
        %v146 = vld [vmem:[#allocation2] sm:$0xff]
        %v147 = vld [vmem:[#allocation2 + $0x8] sm:$0xff]
        %148 = vst [vmem:[%s142] sm:$0xff] %v146
        %149 = vst [vmem:[%s142 + $0x8] sm:$0xff] %v147
        %s150 = sand.u32 %s75, 1
        %s151 = scalar_lea.sflag [#allocation4], %s150
        %s152 = sand.u32 %s75, 1
        %s153 = smul.addr %s152, 16
        %s154 = scalar_lea.vmem [#allocation5], %s153
        // Predicated region
        $region29: #{tpu_custom_call.1} parent=23 // pred_check
          %p155 = pneg %p85
        $region30: #{tpu_custom_call.1} parent=23 // pred_check_branch
          %157 = sbr.rel (%p155) target = $region32
        $region31: #{tpu_custom_call.1} parent=23 // pred_region
          %s158 = sadd.s32 %s23, %s22
          %s159 = smul.u32 2, %s158
          %s161 = ssub.s32 256, 256
          %162 = vsyncadd %s151, %s161
          %s163 = smul.addr %s21, 4
          %s164 = sadd.s32 %s159, %s163
          %s165 = smul.addr %s164, 128
          %s166 = scalar_lea.hbm %s1, %s165
          %s168 = sshll.u32 %s154, 4
          %s169 = int_to_ptr.vmem [resolvable:$true] %s168
          %171 = dma.vmem_to_hbm [thread:$0]  %s169, 256, %s166, %s151
        $region32: #{tpu_custom_call.1} parent=23 // pred_fallthru
          _
      $region24: #{tpu_custom_call.1} parent=5 // pred_fallthru
        _
      %p172 = scmp.le.s32.totalorder 2, %s11
      // Predicated region
      $region33: #{tpu_custom_call.1} parent=5 // pred_check
        %p173 = pneg %p172
      $region34: #{tpu_custom_call.1} parent=5 // pred_check_branch
        %175 = sbr.rel (%p173) target = $region36
      $region35: #{tpu_custom_call.1} parent=5 // pred_region
        %s176 = ssub.s32 %s11, 2
        // Predicated region
        $region37: #{tpu_custom_call.1} parent=35 // pred_check
          %p177 = pneg %p91
        $region38: #{tpu_custom_call.1} parent=35 // pred_check_branch
          %179 = sbr.rel (%p177) target = $region40
        $region39: #{tpu_custom_call.1} parent=35 // pred_region
          %s180 = sand.u32 %s76, 1
          %s181 = scalar_lea.sflag [#allocation4], %s180
          %s182 = sand.u32 %s76, 1
          %s183 = smul.addr %s182, 16
          %s184 = scalar_lea.vmem [#allocation5], %s183
          %185 = dma.done %s181, 256
        $region40: #{tpu_custom_call.1} parent=35 // pred_fallthru
          _
      $region36: #{tpu_custom_call.1} parent=5 // pred_fallthru
        _
    $region6: #{tpu_custom_call.1} parent=1 // loop_footer
      %s15 = sadd.s32 1, %s11
    $region7: #{tpu_custom_call.1} parent=1 // loop_footer_branch
      %10 = sbr.rel target = $region3
    $region8: #{tpu_custom_call.1} parent=1 // loop_exit
      _
    %186 = vsyncpa [#allocation3], 1
    %s187 = scalar_lea.sflag [#allocation3], 1
    %188 = vsyncpa %s187, 1
    %189 = vsyncpa [#allocation4], 1
    %s190 = scalar_lea.sflag [#allocation4], 1
    %191 = vsyncpa %s190, 1

</llo_original>
